<compile_context>
chip_gen: v7x
topology: tpu7x:2x2x1
jax: 0.10.0
libtpu: 0.0.40
codegen_flags: <defaults>
</compile_context>

<pallas_src>
import jax
import jax.numpy as jnp
from jax.experimental import pallas as pl
from jax.experimental.pallas import tpu as pltpu

LANE = 128      # TPU lane width
SUBLANE = 8     # TPU sublane width (f32)


def _round_up(n, m):
    return ((n + m - 1) // m) * m


def make_deepnet_kernel(num_hidden, n_output):
    """Fused MLP kernel: `num_hidden` Linear+ReLU layers then a bias-free
    output Linear.  Stores only the first n_output (true-width) columns."""

    def kernel(x_ref, *refs):
        o_ref = refs[-1]
        prm = refs[:-1]                    # [w0, b0, w1, b1, ..., w_out]
        h = x_ref[...]
        for l in range(num_hidden):
            w = prm[2 * l][...]
            b = prm[2 * l + 1][...]        # (1, out_pad) f32, broadcasts over rows
            # MXU matmul with f32 accumulation; bias + ReLU epilogue in f32
            # (v5e-friendly: no bf16 VPU needed).
            h = jnp.dot(h.astype(w.dtype), w,
                        preferred_element_type=jnp.float32) + b
            h = jnp.maximum(h, 0.0)        # activation = torch.relu
        w_out = prm[2 * num_hidden][...]   # lane-full N for the MXU
        y = jnp.dot(h.astype(w_out.dtype), w_out,
                    preferred_element_type=jnp.float32)
        # True-width store: only n_output real columns go back to HBM.
        o_ref[...] = y[:, :n_output].astype(o_ref.dtype)

    return kernel


def prepare_params(params, *, compute_dtype=jnp.bfloat16, feature_align=LANE):
    """One-time padding + dtype cast of the DeepNet parameters (hoisted out of
    the per-call forward path; reuse the result across forward calls).

    params = (w0t, b0, w1t, b1, ..., w{L-1}t, b{L-1}, wout_t) with weights
    stored transposed as (in, out).

    feature_align: 128 (default; native for v5e's 4x128^2 MXU).  Use 256 on
    v6e/v7x when hidden/output widths exceed 128 (2x256^2 MXU).
    """
    *hidden_params, wout_t = params
    num_hidden = len(hidden_params) // 2
    n_input = hidden_params[0].shape[0] if num_hidden else wout_t.shape[0]
    n_output = wout_t.shape[1]

    padded = []
    prev_pad = n_input                 # x keeps native width (full-dim exception)
    for l in range(num_hidden):
        w_t = hidden_params[2 * l]
        b = hidden_params[2 * l + 1]
        fan_in, fan_out = w_t.shape
        out_pad = _round_up(fan_out, feature_align)
        w_p = jnp.zeros((prev_pad, out_pad), compute_dtype)
        w_p = w_p.at[:fan_in, :fan_out].set(w_t.astype(compute_dtype))
        b_p = jnp.zeros((1, out_pad), jnp.float32)          # epilogue stays f32
        b_p = b_p.at[:, :fan_out].set(b.reshape(1, -1).astype(jnp.float32))
        padded += [w_p, b_p]
        prev_pad = out_pad
    fan_in = wout_t.shape[0]
    out_pad = _round_up(n_output, feature_align)             # lane-full MXU N
    wout_p = jnp.zeros((prev_pad, out_pad), compute_dtype)
    wout_p = wout_p.at[:fan_in, :n_output].set(wout_t.astype(compute_dtype))
    padded.append(wout_p)

    return {
        "padded": tuple(padded),
        "num_hidden": num_hidden,
        "n_input": n_input,
        "n_output": n_output,
        "out_pad": out_pad,
        "compute_dtype": compute_dtype,
    }


def deepnet_forward(x, prepared, *, tile_b=2048, out_dtype=jnp.float32):
    """Forward pass of DeepNet using pre-padded params from prepare_params()."""
    if x.ndim == 1:                       # mirror torch: x.unsqueeze(-1)
        x = x[:, None]
    padded = prepared["padded"]
    num_hidden = prepared["num_hidden"]
    n_input = prepared["n_input"]
    n_output = prepared["n_output"]
    compute_dtype = prepared["compute_dtype"]
    batch = x.shape[0]
    assert x.shape[1] == n_input

    # ---- batch tiling -------------------------------------------------------
    # biggest tile that covers small/medium batches in one step; for large
    # batches keep >=4 grid steps (>=2 per TC on v7x, restores DMA overlap)
    # while keeping tiles >=512 rows to amortize ~0.35us per-step overhead.
    row_align = SUBLANE if jnp.dtype(compute_dtype).itemsize >= 4 else 2 * SUBLANE
    tile_b = max(row_align, min(int(tile_b), _round_up(batch, row_align)))
    tile_b = _round_up(tile_b, row_align)
    if batch > tile_b:
        while tile_b >= 1024 and pl.cdiv(batch, tile_b) < 4:
            tile_b //= 2
    padded_batch = _round_up(batch, tile_b)
    if padded_batch != batch:
        x = jnp.pad(x, ((0, padded_batch - batch), (0, 0)))
    x = x.astype(compute_dtype)
    grid = (padded_batch // tile_b,)

    # ---- specs: x / out stream per grid step, weights & biases VMEM-resident -
    const_spec = lambda shape: pl.BlockSpec(shape, lambda i: (0, 0))
    in_specs = [pl.BlockSpec((tile_b, n_input), lambda i: (i, 0))]
    in_specs += [const_spec(p.shape) for p in padded]
    out_specs = pl.BlockSpec((tile_b, n_output), lambda i: (i, 0))  # true-width

    # ---- VMEM budget (explicit limit so larger tiles aren't rejected) -------
    cd_sz = jnp.dtype(compute_dtype).itemsize
    od_sz = jnp.dtype(out_dtype).itemsize
    prm_bytes = sum(int(p.size) * p.dtype.itemsize for p in padded)
    max_w = max(w.shape[1] for w in padded[0::2])
    vmem_need = (2 * tile_b * n_input * cd_sz          # double-buffered x
                 + 2 * tile_b * n_output * od_sz       # double-buffered out
                 + 2 * prm_bytes                       # resident params
                 + 6 * tile_b * max_w * 4)             # f32 intermediates headroom
    vmem_limit = int(min(64 << 20, max(32 << 20, 2 * vmem_need)))

    # ---- advisory cost estimate ---------------------------------------------
    weight_mats = padded[0::2]
    flops = sum(2 * padded_batch * w.shape[0] * w.shape[1] for w in weight_mats)
    bytes_accessed = (x.size * x.dtype.itemsize + prm_bytes
                      + padded_batch * n_output * od_sz)

    out = pl.pallas_call(
        make_deepnet_kernel(num_hidden, n_output),
        out_shape=jax.ShapeDtypeStruct((padded_batch, n_output), out_dtype),
        grid=grid,
        in_specs=in_specs,
        out_specs=out_specs,
        compiler_params=pltpu.CompilerParams(
            dimension_semantics=("parallel",),      # batch axis -> 2 TCs on v7x
            vmem_limit_bytes=vmem_limit),
        cost_estimate=pl.CostEstimate(
            flops=flops, bytes_accessed=bytes_accessed, transcendentals=0),
    )(x, *padded)

    return out[:batch] if padded_batch != batch else out


def init_params(key, n_input, n_hidden, n_output):
    """Deterministic init mirroring the module: xavier_normal weights,
    standard-normal biases for hidden layers, xavier_normal output weight."""
    dims = [n_input] + list(n_hidden)
    params = []
    for i in range(len(n_hidden)):
        key, kw, kb = jax.random.split(key, 3)
        fan_in, fan_out = dims[i], dims[i + 1]
        std = (2.0 / (fan_in + fan_out)) ** 0.5
        w_t = std * jax.random.normal(kw, (fan_in, fan_out), jnp.float32)  # (in, out)
        b = jax.random.normal(kb, (fan_out,), jnp.float32)
        params += [w_t, b]
    key, kw = jax.random.split(key)
    fan_in, fan_out = n_hidden[-1], n_output
    std = (2.0 / (fan_in + fan_out)) ** 0.5
    wout_t = std * jax.random.normal(kw, (fan_in, fan_out), jnp.float32)
    params.append(wout_t)
    return tuple(params)


def reference_forward(x, params):
    """Pure-JAX reference of DeepNet.forward for correctness checking."""
    *hidden_params, wout_t = params
    num_hidden = len(hidden_params) // 2
    h = x
    for l in range(num_hidden):
        w_t = hidden_params[2 * l]
        b = hidden_params[2 * l + 1]
        h = jnp.maximum(h @ w_t + b[None, :], 0.0)
    return h @ wout_t


if __name__ == "__main__":
    # Equivalent of: DeepNet(torch.relu, n_input=8, n_hidden=[32, 32, 32], n_output=4)
    n_input, n_hidden, n_output = 8, [32, 32, 32], 4
    batch = 8

    key = jax.random.PRNGKey(0)
    key, kx = jax.random.split(key)
    x = jax.random.normal(kx, (batch, n_input), jnp.float32)
    params = init_params(key, n_input, n_hidden, n_output)
    ref = reference_forward(x, params)

    # f32 path (single grid step), tight tolerance
    prep_f32 = prepare_params(params, compute_dtype=jnp.float32)
    out_f32 = jax.block_until_ready(deepnet_forward(x, prep_f32))
    assert out_f32.shape == (batch, n_output)
    assert jnp.allclose(out_f32, ref, atol=1e-4, rtol=1e-4)

    # default bf16 compute path (MXU-native; f32 accumulation + f32 epilogue)
    prep_bf16 = prepare_params(params)
    out_bf16 = jax.block_until_ready(deepnet_forward(x, prep_bf16))
    rel = jnp.max(jnp.abs(out_bf16 - ref)) / (jnp.max(jnp.abs(ref)) + 1e-6)
    assert rel < 1e-1

    # larger batch: exercises the pipelined / megacore grid path (grid=4) and
    # batch padding (1000 -> 1024)
    key, kb = jax.random.split(key)
    x_big = jax.random.normal(kb, (1000, n_input), jnp.float32)
    ref_big = reference_forward(x_big, params)
    out_big = jax.block_until_ready(deepnet_forward(x_big, prep_f32, tile_b=256))
    assert out_big.shape == (1000, n_output)
    assert jnp.allclose(out_big, ref_big, atol=1e-4, rtol=1e-4)

    # large batch, bf16 weights/x, single big tile (default tile_b)
    out_big_bf16 = jax.block_until_ready(deepnet_forward(x_big, prep_bf16))
    rel_big = (jnp.max(jnp.abs(out_big_bf16 - ref_big))
               / (jnp.max(jnp.abs(ref_big)) + 1e-6))
    assert rel_big < 1e-1

    # TODO(synk): gradient/laplacian/lsgd/box_init/output_layer are autograd /
    # training / init utilities, not part of forward(); only forward() is a kernel.
    print("KERNEL_OK")
</pallas_src>

<mosaic_0001>
module attributes {stable_mosaic.version = 11 : i64} {
  func.func @kernel(%arg0: i32, %arg1: memref<8x8xf32, #tpu.memory_space<vmem>>, %arg2: memref<8x128xf32, #tpu.memory_space<vmem>>, %arg3: memref<1x128xf32, #tpu.memory_space<vmem>>, %arg4: memref<128x128xf32, #tpu.memory_space<vmem>>, %arg5: memref<1x128xf32, #tpu.memory_space<vmem>>, %arg6: memref<128x128xf32, #tpu.memory_space<vmem>>, %arg7: memref<1x128xf32, #tpu.memory_space<vmem>>, %arg8: memref<128x128xf32, #tpu.memory_space<vmem>>, %arg9: memref<8x4xf32, #tpu.memory_space<vmem>>) attributes {dimension_semantics = [#tpu.dimension_semantics<parallel>], iteration_bounds = array<i64: 1>, scalar_prefetch = 0 : i64, scratch_operands = 0 : i64, tpu.core_type = #tpu.core_type<tc>, window_params = [{transform_indices = @transform_0, window_bounds = array<i64: 8, 8>}, {pipeline_mode = #tpu.pipeline_mode<synchronous>, transform_indices = @transform_1, window_bounds = array<i64: 8, 128>}, {pipeline_mode = #tpu.pipeline_mode<synchronous>, transform_indices = @transform_2, window_bounds = array<i64: 1, 128>}, {pipeline_mode = #tpu.pipeline_mode<synchronous>, transform_indices = @transform_3, window_bounds = array<i64: 128, 128>}, {pipeline_mode = #tpu.pipeline_mode<synchronous>, transform_indices = @transform_4, window_bounds = array<i64: 1, 128>}, {pipeline_mode = #tpu.pipeline_mode<synchronous>, transform_indices = @transform_5, window_bounds = array<i64: 128, 128>}, {pipeline_mode = #tpu.pipeline_mode<synchronous>, transform_indices = @transform_6, window_bounds = array<i64: 1, 128>}, {pipeline_mode = #tpu.pipeline_mode<synchronous>, transform_indices = @transform_7, window_bounds = array<i64: 128, 128>}, {transform_indices = @transform_8, window_bounds = array<i64: 8, 4>}]} {
    %c0 = arith.constant 0 : index
    %c0_0 = arith.constant 0 : index
    %0 = vector.load %arg1[%c0, %c0_0] : memref<8x8xf32, #tpu.memory_space<vmem>>, vector<8x8xf32>
    %c0_1 = arith.constant 0 : index
    %c0_2 = arith.constant 0 : index
    %1 = vector.load %arg2[%c0_1, %c0_2] : memref<8x128xf32, #tpu.memory_space<vmem>>, vector<8x128xf32>
    %c0_3 = arith.constant 0 : index
    %c0_4 = arith.constant 0 : index
    %2 = vector.load %arg3[%c0_3, %c0_4] : memref<1x128xf32, #tpu.memory_space<vmem>>, vector<1x128xf32>
    %cst = arith.constant dense<0.000000e+00> : vector<8x128xf32>
    %3 = tpu.matmul %0, %1, %cst {dimension_numbers = #tpu.dot_dimension_numbers<[1], [0], [0], [1], [0, 0, 1, 1], [], []>} : vector<8x8xf32>, vector<8x128xf32>, vector<8x128xf32> -> vector<8x128xf32>
    %4 = vector.broadcast %2 : vector<1x128xf32> to vector<8x128xf32>
    %5 = arith.addf %3, %4 : vector<8x128xf32>
    %cst_5 = arith.constant 0.000000e+00 : f32
    %6 = vector.broadcast %cst_5 : f32 to vector<8x128xf32>
    %7 = arith.maximumf %5, %6 : vector<8x128xf32>
    %c0_6 = arith.constant 0 : index
    %c0_7 = arith.constant 0 : index
    %8 = vector.load %arg4[%c0_6, %c0_7] : memref<128x128xf32, #tpu.memory_space<vmem>>, vector<128x128xf32>
    %c0_8 = arith.constant 0 : index
    %c0_9 = arith.constant 0 : index
    %9 = vector.load %arg5[%c0_8, %c0_9] : memref<1x128xf32, #tpu.memory_space<vmem>>, vector<1x128xf32>
    %cst_10 = arith.constant dense<0.000000e+00> : vector<8x128xf32>
    %10 = tpu.matmul %7, %8, %cst_10 {dimension_numbers = #tpu.dot_dimension_numbers<[1], [0], [0], [1], [0, 0, 1, 1], [], []>} : vector<8x128xf32>, vector<128x128xf32>, vector<8x128xf32> -> vector<8x128xf32>
    %11 = vector.broadcast %9 : vector<1x128xf32> to vector<8x128xf32>
    %12 = arith.addf %10, %11 : vector<8x128xf32>
    %cst_11 = arith.constant 0.000000e+00 : f32
    %13 = vector.broadcast %cst_11 : f32 to vector<8x128xf32>
    %14 = arith.maximumf %12, %13 : vector<8x128xf32>
    %c0_12 = arith.constant 0 : index
    %c0_13 = arith.constant 0 : index
    %15 = vector.load %arg6[%c0_12, %c0_13] : memref<128x128xf32, #tpu.memory_space<vmem>>, vector<128x128xf32>
    %c0_14 = arith.constant 0 : index
    %c0_15 = arith.constant 0 : index
    %16 = vector.load %arg7[%c0_14, %c0_15] : memref<1x128xf32, #tpu.memory_space<vmem>>, vector<1x128xf32>
    %cst_16 = arith.constant dense<0.000000e+00> : vector<8x128xf32>
    %17 = tpu.matmul %14, %15, %cst_16 {dimension_numbers = #tpu.dot_dimension_numbers<[1], [0], [0], [1], [0, 0, 1, 1], [], []>} : vector<8x128xf32>, vector<128x128xf32>, vector<8x128xf32> -> vector<8x128xf32>
    %18 = vector.broadcast %16 : vector<1x128xf32> to vector<8x128xf32>
    %19 = arith.addf %17, %18 : vector<8x128xf32>
    %cst_17 = arith.constant 0.000000e+00 : f32
    %20 = vector.broadcast %cst_17 : f32 to vector<8x128xf32>
    %21 = arith.maximumf %19, %20 : vector<8x128xf32>
    %c0_18 = arith.constant 0 : index
    %c0_19 = arith.constant 0 : index
    %22 = vector.load %arg8[%c0_18, %c0_19] : memref<128x128xf32, #tpu.memory_space<vmem>>, vector<128x128xf32>
    %cst_20 = arith.constant dense<0.000000e+00> : vector<8x128xf32>
    %23 = tpu.matmul %21, %22, %cst_20 {dimension_numbers = #tpu.dot_dimension_numbers<[1], [0], [0], [1], [0, 0, 1, 1], [], []>} : vector<8x128xf32>, vector<128x128xf32>, vector<8x128xf32> -> vector<8x128xf32>
    %24 = vector.extract_strided_slice %23 {offsets = [0, 0], sizes = [8, 4], strides = [1, 1]} : vector<8x128xf32> to vector<8x4xf32>
    %c0_21 = arith.constant 0 : index
    %c0_22 = arith.constant 0 : index
    %25 = vector.load %arg9[%c0_21, %c0_22] : memref<8x4xf32, #tpu.memory_space<vmem>>, vector<8x4xf32>
    tpu.vector_store %arg9[%c0_21, %c0_22], %24 {strides = array<i32>} : memref<8x4xf32, #tpu.memory_space<vmem>>, vector<8x4xf32>,
    return
  }
  func.func @transform_0(%arg0: i32) -> (i32, i32) {
    %c0_i32 = arith.constant 0 : i32
    %c0_i32_0 = arith.constant 0 : i32
    return %arg0, %c0_i32 : i32, i32
  }
  func.func @transform_1(%arg0: i32) -> (i32, i32) {
    %c0_i32 = arith.constant 0 : i32
    %c0_i32_0 = arith.constant 0 : i32
    %c0_i32_1 = arith.constant 0 : i32
    return %c0_i32, %c0_i32_0 : i32, i32
  }
  func.func @transform_2(%arg0: i32) -> (i32, i32) {
    %c0_i32 = arith.constant 0 : i32
    %c0_i32_0 = arith.constant 0 : i32
    %c0_i32_1 = arith.constant 0 : i32
    return %c0_i32, %c0_i32_0 : i32, i32
  }
  func.func @transform_3(%arg0: i32) -> (i32, i32) {
    %c0_i32 = arith.constant 0 : i32
    %c0_i32_0 = arith.constant 0 : i32
    %c0_i32_1 = arith.constant 0 : i32
    return %c0_i32, %c0_i32_0 : i32, i32
  }
  func.func @transform_4(%arg0: i32) -> (i32, i32) {
    %c0_i32 = arith.constant 0 : i32
    %c0_i32_0 = arith.constant 0 : i32
    %c0_i32_1 = arith.constant 0 : i32
    return %c0_i32, %c0_i32_0 : i32, i32
  }
  func.func @transform_5(%arg0: i32) -> (i32, i32) {
    %c0_i32 = arith.constant 0 : i32
    %c0_i32_0 = arith.constant 0 : i32
    %c0_i32_1 = arith.constant 0 : i32
    return %c0_i32, %c0_i32_0 : i32, i32
  }
  func.func @transform_6(%arg0: i32) -> (i32, i32) {
    %c0_i32 = arith.constant 0 : i32
    %c0_i32_0 = arith.constant 0 : i32
    %c0_i32_1 = arith.constant 0 : i32
    return %c0_i32, %c0_i32_0 : i32, i32
  }
  func.func @transform_7(%arg0: i32) -> (i32, i32) {
    %c0_i32 = arith.constant 0 : i32
    %c0_i32_0 = arith.constant 0 : i32
    %c0_i32_1 = arith.constant 0 : i32
    return %c0_i32, %c0_i32_0 : i32, i32
  }
  func.func @transform_8(%arg0: i32) -> (i32, i32) {
    %c0_i32 = arith.constant 0 : i32
    %c0_i32_0 = arith.constant 0 : i32
    return %arg0, %c0_i32 : i32, i32
  }
}

</mosaic_0001>

<llo_original>
// kernel: tpu_custom_call.1
$region0: #{tpu_custom_call.1}
  #allocation0 [shape = 'u32[]', space=smem, size = 0x4, offset = 0x4, fixed_abs, tag = 'smem constant byte address 0x4 - core index']
  #allocation1 [shape = 'u32[144,128]{1,0:T(1,128)}', space=vmem, size = 0x12000, scoped, tag = 'internal scratch']
  %s0 = inlined_call_operand.hbm [shape: f32[8,8], index: 0, kind: input, shape index: {}]
  %s1 = inlined_call_operand.hbm [shape: f32[8,128], index: 1, kind: input, shape index: {}]
  %s2 = inlined_call_operand.vmem [shape: f32[1,128], index: 2, kind: input, shape index: {}]
  %s3 = inlined_call_operand.hbm [shape: f32[128,128], index: 3, kind: input, shape index: {}]
  %s4 = inlined_call_operand.vmem [shape: f32[1,128], index: 4, kind: input, shape index: {}]
  %s5 = inlined_call_operand.hbm [shape: f32[128,128], index: 5, kind: input, shape index: {}]
  %s6 = inlined_call_operand.vmem [shape: f32[1,128], index: 6, kind: input, shape index: {}]
  %s7 = inlined_call_operand.hbm [shape: f32[128,128], index: 7, kind: input, shape index: {}]
  %s8 = inlined_call_operand.vmem [shape: f32[8,4], index: 8, kind: output, shape index: {}]
  %s9 = sld [smem:[#allocation0]]
  $region62: #{tpu_custom_call.1} parent=0
    _
  %s11 = ssub.s32 1, %s9
  %s12 = scalar_select 0, %s11, %s9
  $region1: #{tpu_custom_call.1} parent=0
    #allocation2 [shape = 'u8[4096]{0}', space=vmem, size = 0x1000, scoped, tag = 'input window, operand 0, single buffered']
    #allocation3 [shape = 's32[1]{0}', space=sflag, size = 0x4, scoped, tag = 'scoped memory for tpu_custom_call.1']
    #allocation4 [shape = 'u8[4096]{0}', space=vmem, size = 0x1000, scoped, tag = 'input window, operand 1, single buffered']
    #allocation5 [shape = 's32[1]{0}', space=sflag, size = 0x4, scoped, tag = 'scoped memory for tpu_custom_call.1']
    #allocation6 [shape = 'u8[65536]{0}', space=vmem, size = 0x10000, scoped, tag = 'input window, operand 3, single buffered']
    #allocation7 [shape = 'u8[65536]{0}', space=vmem, size = 0x10000, scoped, tag = 'input window, operand 5, single buffered']
    #allocation8 [shape = 's32[1]{0}', space=sflag, size = 0x4, scoped, tag = 'scoped memory for tpu_custom_call.1']
    #allocation9 [shape = 'u8[65536]{0}', space=vmem, size = 0x10000, scoped, tag = 'input window, operand 7, single buffered']
    %13 = vsyncpa [#allocation3], 0
    %14 = vsyncpa [#allocation5], 0
    %15 = vsyncpa [#allocation8], 0
    // Predicated region
    $region2: #{tpu_custom_call.1} parent=1 // pred_check
      _
    $region3: #{tpu_custom_call.1} parent=1 // pred_check_branch
      %17 = sbr.rel (0) target = $region5
    $region4: #{tpu_custom_call.1} parent=1 // pred_region
      %s19 = ssub.s32 128, 128
      %20 = vsyncadd [#allocation3], %s19
      %s22 = sshll.u32 [#allocation2], 4
      %s23 = int_to_ptr.vmem [resolvable:$true] %s22
      %25 = dma.hbm_to_vmem [thread:$0]  %s0, 128, %s23, [#allocation3]
    $region5: #{tpu_custom_call.1} parent=1 // pred_fallthru
      _
    // Predicated region
    $region6: #{tpu_custom_call.1} parent=1 // pred_check
      _
    $region7: #{tpu_custom_call.1} parent=1 // pred_check_branch
      %27 = sbr.rel (0) target = $region9
    $region8: #{tpu_custom_call.1} parent=1 // pred_region
      %s29 = ssub.s32 128, 128
      %30 = vsyncadd [#allocation5], %s29
      %s32 = sshll.u32 [#allocation4], 4
      %s33 = int_to_ptr.vmem [resolvable:$true] %s32
      %35 = dma.hbm_to_vmem [thread:$0]  %s1, 128, %s33, [#allocation5]
    $region9: #{tpu_custom_call.1} parent=1 // pred_fallthru
      _
    // Predicated region
    $region10: #{tpu_custom_call.1} parent=1 // pred_check
      _
    $region11: #{tpu_custom_call.1} parent=1 // pred_check_branch
      %37 = sbr.rel (0) target = $region13
    $region12: #{tpu_custom_call.1} parent=1 // pred_region
      _
    $region13: #{tpu_custom_call.1} parent=1 // pred_fallthru
      _
    // Predicated region
    $region14: #{tpu_custom_call.1} parent=1 // pred_check
      _
    $region15: #{tpu_custom_call.1} parent=1 // pred_check_branch
      %39 = sbr.rel (0) target = $region17
    $region16: #{tpu_custom_call.1} parent=1 // pred_region
      %s41 = ssub.s32 2048, 2048
      %42 = vsyncadd [#allocation5], %s41
      %s43 = sshll.u32 [#allocation6], 4
      %s44 = int_to_ptr.vmem [resolvable:$true] %s43
      %49 = dma.hbm_to_vmem [thread:$0]  %s3, 2048, %s44, [#allocation5], 128, 128, 8
    $region17: #{tpu_custom_call.1} parent=1 // pred_fallthru
      _
    // Predicated region
    $region18: #{tpu_custom_call.1} parent=1 // pred_check
      _
    $region19: #{tpu_custom_call.1} parent=1 // pred_check_branch
      %51 = sbr.rel (0) target = $region21
    $region20: #{tpu_custom_call.1} parent=1 // pred_region
      _
    $region21: #{tpu_custom_call.1} parent=1 // pred_fallthru
      _
    // Predicated region
    $region22: #{tpu_custom_call.1} parent=1 // pred_check
      _
    $region23: #{tpu_custom_call.1} parent=1 // pred_check_branch
      %53 = sbr.rel (0) target = $region25
    $region24: #{tpu_custom_call.1} parent=1 // pred_region
      %s55 = ssub.s32 2048, 2048
      %56 = vsyncadd [#allocation8], %s55
      %s57 = sshll.u32 [#allocation7], 4
      %s58 = int_to_ptr.vmem [resolvable:$true] %s57
      %63 = dma.hbm_to_vmem [thread:$0]  %s5, 2048, %s58, [#allocation8], 128, 128, 8
    $region25: #{tpu_custom_call.1} parent=1 // pred_fallthru
      _
    // Predicated region
    $region26: #{tpu_custom_call.1} parent=1 // pred_check
      _
    $region27: #{tpu_custom_call.1} parent=1 // pred_check_branch
      %65 = sbr.rel (0) target = $region29
    $region28: #{tpu_custom_call.1} parent=1 // pred_region
      _
    $region29: #{tpu_custom_call.1} parent=1 // pred_fallthru
      _
    // Predicated region
    $region30: #{tpu_custom_call.1} parent=1 // pred_check
      _
    $region31: #{tpu_custom_call.1} parent=1 // pred_check_branch
      %67 = sbr.rel (0) target = $region33
    $region32: #{tpu_custom_call.1} parent=1 // pred_region
      %s69 = ssub.s32 2048, 2048
      %70 = vsyncadd [#allocation8], %s69
      %s71 = sshll.u32 [#allocation9], 4
      %s72 = int_to_ptr.vmem [resolvable:$true] %s71
      %77 = dma.hbm_to_vmem [thread:$0]  %s7, 2048, %s72, [#allocation8], 128, 128, 8
    $region33: #{tpu_custom_call.1} parent=1 // pred_fallthru
      _
    // Predicated region
    $region34: #{tpu_custom_call.1} parent=1 // pred_check
      _
    $region35: #{tpu_custom_call.1} parent=1 // pred_check_branch
      %79 = sbr.rel (0) target = $region37
    $region36: #{tpu_custom_call.1} parent=1 // pred_region
      %80 = dma.done [#allocation3], 128
    $region37: #{tpu_custom_call.1} parent=1 // pred_fallthru
      _
    // Predicated region
    $region38: #{tpu_custom_call.1} parent=1 // pred_check
      _
    $region39: #{tpu_custom_call.1} parent=1 // pred_check_branch
      %82 = sbr.rel (0) target = $region41
    $region40: #{tpu_custom_call.1} parent=1 // pred_region
      %83 = dma.done [#allocation5], 128
    $region41: #{tpu_custom_call.1} parent=1 // pred_fallthru
      _
    // Predicated region
    $region42: #{tpu_custom_call.1} parent=1 // pred_check
      _
    $region43: #{tpu_custom_call.1} parent=1 // pred_check_branch
      %85 = sbr.rel (0) target = $region45
    $region44: #{tpu_custom_call.1} parent=1 // pred_region
      %86 = dma.done [#allocation5], 2048
    $region45: #{tpu_custom_call.1} parent=1 // pred_fallthru
      _
    // Predicated region
    $region46: #{tpu_custom_call.1} parent=1 // pred_check
      _
    $region47: #{tpu_custom_call.1} parent=1 // pred_check_branch
      %88 = sbr.rel (0) target = $region49
    $region48: #{tpu_custom_call.1} parent=1 // pred_region
      %89 = dma.done [#allocation8], 2048
    $region49: #{tpu_custom_call.1} parent=1 // pred_fallthru
      _
    // Predicated region
    $region50: #{tpu_custom_call.1} parent=1 // pred_check
      _
    $region51: #{tpu_custom_call.1} parent=1 // pred_check_branch
      %91 = sbr.rel (0) target = $region53
    $region52: #{tpu_custom_call.1} parent=1 // pred_region
      %92 = dma.done [#allocation8], 2048
    $region53: #{tpu_custom_call.1} parent=1 // pred_fallthru
      _
    %v93 = vld [vmem:[#allocation2] sm:$0xff]
    %v94 = vld [vmem:[#allocation4] sm:$0xff]
    %v95 = vld [vmem:[%s2] sm:$0x1]
    %v97 = vlaneseq
    %v98 = vshrl.u32 %v97, 7
    %v99 = vsub.s32 0, %v98
    %v100 = vrot.slane %v95, %v99
    %vm102 = vcmask 64512
    %v104 = vsel %vm102, %v93, 0
    %106 = vmatprep.subr.mxu0 0.0
    %107 = vmatpush1.msra.mxu0 %v94
    %108 = vmatprep.subr.mxu0 0.0
    %109 = vmatpush1.msra.mxu0 0.0
    %110 = vmatprep.subr.mxu0 0.0
    %111 = vmatpush1.msra.mxu0 0.0
    %112 = vmatprep.subr.mxu0 0.0
    %113 = vmatpush1.msra.mxu0 0.0
    %114 = vmatprep.subr.mxu0 0.0
    %115 = vmatpush1.msra.mxu0 0.0
    %116 = vmatprep.subr.mxu0 0.0
    %117 = vmatpush1.msra.mxu0 0.0
    %118 = vmatprep.subr.mxu0 0.0
    %119 = vmatpush1.msra.mxu0 0.0
    %120 = vmatprep.subr.mxu0 0.0
    %121 = vmatpush1.msra.mxu0 0.0
    %122 = vmatprep.subr.mxu0 0.0
    %123 = vmatpush1.msra.mxu0 0.0
    %124 = vmatprep.subr.mxu0 0.0
    %125 = vmatpush1.msra.mxu0 0.0
    %126 = vmatprep.subr.mxu0 0.0
    %127 = vmatpush1.msra.mxu0 0.0
    %128 = vmatprep.subr.mxu0 0.0
    %129 = vmatpush1.msra.mxu0 0.0
    %130 = vmatprep.subr.mxu0 0.0
    %131 = vmatpush1.msra.mxu0 0.0
    %132 = vmatprep.subr.mxu0 0.0
    %133 = vmatpush1.msra.mxu0 0.0
    %134 = vmatprep.subr.mxu0 0.0
    %135 = vmatpush1.msra.mxu0 0.0
    %136 = vmatprep.subr.mxu0 0.0
    %137 = vmatpush1.msra.mxu0 0.0
    %138 = vmatprep.subr.mxu0 0.0
    %139 = vmatpush1.msra.mxu0 0.0
    %140 = vmatprep.subr.mxu0 0.0
    %141 = vmatpush1.msra.mxu0 0.0
    %142 = vmatprep.subr.mxu0 0.0
    %143 = vmatpush1.msra.mxu0 0.0
    %144 = vmatprep.subr.mxu0 0.0
    %145 = vmatpush1.msra.mxu0 0.0
    %146 = vmatprep.subr.mxu0 0.0
    %147 = vmatpush1.msra.mxu0 0.0
    %148 = vmatprep.subr.mxu0 0.0
    %149 = vmatpush1.msra.mxu0 0.0
    %150 = vmatprep.subr.mxu0 0.0
    %151 = vmatpush1.msra.mxu0 0.0
    %152 = vmatprep.subr.mxu0 0.0
    %153 = vmatpush1.msra.mxu0 0.0
    %154 = vmatprep.subr.mxu0 0.0
    %155 = vmatpush1.msra.mxu0 0.0
    %156 = vmatprep.subr.mxu0 0.0
    %157 = vmatpush1.msra.mxu0 0.0
    %158 = vmatprep.subr.mxu0 0.0
    %159 = vmatpush1.msra.mxu0 0.0
    %160 = vmatprep.subr.mxu0 0.0
    %161 = vmatpush1.msra.mxu0 0.0
    %162 = vmatprep.subr.mxu0 0.0
    %163 = vmatpush1.msra.mxu0 0.0
    %164 = vmatprep.subr.mxu0 0.0
    %165 = vmatpush1.msra.mxu0 0.0
    %166 = vmatprep.subr.mxu0 0.0
    %167 = vmatpush1.msra.mxu0 0.0
    %168 = vmatprep.subr.mxu0 0.0
    %169 = vmatpush1.msra.mxu0 0.0
    %170 = vmatprep.mubr.f32.mxu0 0.0
    %171 = vmatmul.mubr.f32.gmra.mrb[0].mxu0 %v104
    %v172 = vpop.f32.mrb[0].mxu0
    %v173 = vadd.f32 %v100, %v172
    %v174 = vpop.f32.mrb[0].mxu0
    %175 = vdwg.mxu0
    %v176 = vmax.f32 %v173, 0.0
    %v177 = vld [vmem:[#allocation6] sm:$0xff]
    %v178 = vld [vmem:[#allocation6 + $0x8] sm:$0xff]
    %v179 = vld [vmem:[#allocation6 + $0x10] sm:$0xff]
    %v180 = vld [vmem:[#allocation6 + $0x18] sm:$0xff]
    %v181 = vld [vmem:[#allocation6 + $0x20] sm:$0xff]
    %v182 = vld [vmem:[#allocation6 + $0x28] sm:$0xff]
    %v183 = vld [vmem:[#allocation6 + $0x30] sm:$0xff]
    %v184 = vld [vmem:[#allocation6 + $0x38] sm:$0xff]
    %v185 = vld [vmem:[#allocation6 + $0x40] sm:$0xff]
    %v186 = vld [vmem:[#allocation6 + $0x48] sm:$0xff]
    %v187 = vld [vmem:[#allocation6 + $0x50] sm:$0xff]
    %v188 = vld [vmem:[#allocation6 + $0x58] sm:$0xff]
    %v189 = vld [vmem:[#allocation6 + $0x60] sm:$0xff]
    %v190 = vld [vmem:[#allocation6 + $0x68] sm:$0xff]
    %v191 = vld [vmem:[#allocation6 + $0x70] sm:$0xff]
    %v192 = vld [vmem:[#allocation6 + $0x78] sm:$0xff]
    %v193 = vld [vmem:[%s4] sm:$0x1]
    %v195 = vlaneseq
    %v196 = vshrl.u32 %v195, 7
    %v197 = vsub.s32 0, %v196
    %v198 = vrot.slane %v193, %v197
    %200 = vmatprep.subr.mxu0 0.0
    %201 = vmatpush1.msra.mxu0 %v177
    %202 = vmatprep.subr.mxu0 0.0
    %203 = vmatpush1.msra.mxu0 %v178
    %204 = vmatprep.subr.mxu0 0.0
    %205 = vmatpush1.msra.mxu0 %v179
    %206 = vmatprep.subr.mxu0 0.0
    %207 = vmatpush1.msra.mxu0 %v180
    %208 = vmatprep.subr.mxu0 0.0
    %209 = vmatpush1.msra.mxu0 %v181
    %210 = vmatprep.subr.mxu0 0.0
    %211 = vmatpush1.msra.mxu0 %v182
    %212 = vmatprep.subr.mxu0 0.0
    %213 = vmatpush1.msra.mxu0 %v183
    %214 = vmatprep.subr.mxu0 0.0
    %215 = vmatpush1.msra.mxu0 %v184
    %216 = vmatprep.subr.mxu0 0.0
    %217 = vmatpush1.msra.mxu0 %v185
    %218 = vmatprep.subr.mxu0 0.0
    %219 = vmatpush1.msra.mxu0 %v186
    %220 = vmatprep.subr.mxu0 0.0
    %221 = vmatpush1.msra.mxu0 %v187
    %222 = vmatprep.subr.mxu0 0.0
    %223 = vmatpush1.msra.mxu0 %v188
    %224 = vmatprep.subr.mxu0 0.0
    %225 = vmatpush1.msra.mxu0 %v189
    %226 = vmatprep.subr.mxu0 0.0
    %227 = vmatpush1.msra.mxu0 %v190
    %228 = vmatprep.subr.mxu0 0.0
    %229 = vmatpush1.msra.mxu0 %v191
    %230 = vmatprep.subr.mxu0 0.0
    %231 = vmatpush1.msra.mxu0 %v192
    %232 = vmatprep.subr.mxu0 0.0
    %233 = vmatpush1.msra.mxu0 0.0
    %234 = vmatprep.subr.mxu0 0.0
    %235 = vmatpush1.msra.mxu0 0.0
    %236 = vmatprep.subr.mxu0 0.0
    %237 = vmatpush1.msra.mxu0 0.0
    %238 = vmatprep.subr.mxu0 0.0
    %239 = vmatpush1.msra.mxu0 0.0
    %240 = vmatprep.subr.mxu0 0.0
    %241 = vmatpush1.msra.mxu0 0.0
    %242 = vmatprep.subr.mxu0 0.0
    %243 = vmatpush1.msra.mxu0 0.0
    %244 = vmatprep.subr.mxu0 0.0
    %245 = vmatpush1.msra.mxu0 0.0
    %246 = vmatprep.subr.mxu0 0.0
    %247 = vmatpush1.msra.mxu0 0.0
    %248 = vmatprep.subr.mxu0 0.0
    %249 = vmatpush1.msra.mxu0 0.0
    %250 = vmatprep.subr.mxu0 0.0
    %251 = vmatpush1.msra.mxu0 0.0
    %252 = vmatprep.subr.mxu0 0.0
    %253 = vmatpush1.msra.mxu0 0.0
    %254 = vmatprep.subr.mxu0 0.0
    %255 = vmatpush1.msra.mxu0 0.0
    %256 = vmatprep.subr.mxu0 0.0
    %257 = vmatpush1.msra.mxu0 0.0
    %258 = vmatprep.subr.mxu0 0.0
    %259 = vmatpush1.msra.mxu0 0.0
    %260 = vmatprep.subr.mxu0 0.0
    %261 = vmatpush1.msra.mxu0 0.0
    %262 = vmatprep.subr.mxu0 0.0
    %263 = vmatpush1.msra.mxu0 0.0
    %264 = vmatprep.mubr.f32.mxu0 0.0
    %265 = vmatmul.mubr.f32.gmra.mrb[0].mxu0 %v176
    %v266 = vpop.f32.mrb[0].mxu0
    %v267 = vadd.f32 %v198, %v266
    %v268 = vpop.f32.mrb[0].mxu0
    %269 = vdwg.mxu0
    %v270 = vmax.f32 %v267, 0.0
    %v271 = vld [vmem:[#allocation7] sm:$0xff]
    %v272 = vld [vmem:[#allocation7 + $0x8] sm:$0xff]
    %v273 = vld [vmem:[#allocation7 + $0x10] sm:$0xff]
    %v274 = vld [vmem:[#allocation7 + $0x18] sm:$0xff]
    %v275 = vld [vmem:[#allocation7 + $0x20] sm:$0xff]
    %v276 = vld [vmem:[#allocation7 + $0x28] sm:$0xff]
    %v277 = vld [vmem:[#allocation7 + $0x30] sm:$0xff]
    %v278 = vld [vmem:[#allocation7 + $0x38] sm:$0xff]
    %v279 = vld [vmem:[#allocation7 + $0x40] sm:$0xff]
    %v280 = vld [vmem:[#allocation7 + $0x48] sm:$0xff]
    %v281 = vld [vmem:[#allocation7 + $0x50] sm:$0xff]
    %v282 = vld [vmem:[#allocation7 + $0x58] sm:$0xff]
    %v283 = vld [vmem:[#allocation7 + $0x60] sm:$0xff]
    %v284 = vld [vmem:[#allocation7 + $0x68] sm:$0xff]
    %v285 = vld [vmem:[#allocation7 + $0x70] sm:$0xff]
    %v286 = vld [vmem:[#allocation7 + $0x78] sm:$0xff]
    %v287 = vld [vmem:[%s6] sm:$0x1]
    %v289 = vlaneseq
    %v290 = vshrl.u32 %v289, 7
    %v291 = vsub.s32 0, %v290
    %v292 = vrot.slane %v287, %v291
    %294 = vmatprep.subr.mxu0 0.0
    %295 = vmatpush1.msra.mxu0 %v271
    %296 = vmatprep.subr.mxu0 0.0
    %297 = vmatpush1.msra.mxu0 %v272
    %298 = vmatprep.subr.mxu0 0.0
    %299 = vmatpush1.msra.mxu0 %v273
    %300 = vmatprep.subr.mxu0 0.0
    %301 = vmatpush1.msra.mxu0 %v274
    %302 = vmatprep.subr.mxu0 0.0
    %303 = vmatpush1.msra.mxu0 %v275
    %304 = vmatprep.subr.mxu0 0.0
    %305 = vmatpush1.msra.mxu0 %v276
    %306 = vmatprep.subr.mxu0 0.0
    %307 = vmatpush1.msra.mxu0 %v277
    %308 = vmatprep.subr.mxu0 0.0
    %309 = vmatpush1.msra.mxu0 %v278
    %310 = vmatprep.subr.mxu0 0.0
    %311 = vmatpush1.msra.mxu0 %v279
    %312 = vmatprep.subr.mxu0 0.0
    %313 = vmatpush1.msra.mxu0 %v280
    %314 = vmatprep.subr.mxu0 0.0
    %315 = vmatpush1.msra.mxu0 %v281
    %316 = vmatprep.subr.mxu0 0.0
    %317 = vmatpush1.msra.mxu0 %v282
    %318 = vmatprep.subr.mxu0 0.0
    %319 = vmatpush1.msra.mxu0 %v283
    %320 = vmatprep.subr.mxu0 0.0
    %321 = vmatpush1.msra.mxu0 %v284
    %322 = vmatprep.subr.mxu0 0.0
    %323 = vmatpush1.msra.mxu0 %v285
    %324 = vmatprep.subr.mxu0 0.0
    %325 = vmatpush1.msra.mxu0 %v286
    %326 = vmatprep.subr.mxu0 0.0
    %327 = vmatpush1.msra.mxu0 0.0
    %328 = vmatprep.subr.mxu0 0.0
    %329 = vmatpush1.msra.mxu0 0.0
    %330 = vmatprep.subr.mxu0 0.0
    %331 = vmatpush1.msra.mxu0 0.0
    %332 = vmatprep.subr.mxu0 0.0
    %333 = vmatpush1.msra.mxu0 0.0
    %334 = vmatprep.subr.mxu0 0.0
    %335 = vmatpush1.msra.mxu0 0.0
    %336 = vmatprep.subr.mxu0 0.0
    %337 = vmatpush1.msra.mxu0 0.0
    %338 = vmatprep.subr.mxu0 0.0
    %339 = vmatpush1.msra.mxu0 0.0
    %340 = vmatprep.subr.mxu0 0.0
    %341 = vmatpush1.msra.mxu0 0.0
    %342 = vmatprep.subr.mxu0 0.0
    %343 = vmatpush1.msra.mxu0 0.0
    %344 = vmatprep.subr.mxu0 0.0
    %345 = vmatpush1.msra.mxu0 0.0
    %346 = vmatprep.subr.mxu0 0.0
    %347 = vmatpush1.msra.mxu0 0.0
    %348 = vmatprep.subr.mxu0 0.0
    %349 = vmatpush1.msra.mxu0 0.0
    %350 = vmatprep.subr.mxu0 0.0
    %351 = vmatpush1.msra.mxu0 0.0
    %352 = vmatprep.subr.mxu0 0.0
    %353 = vmatpush1.msra.mxu0 0.0
    %354 = vmatprep.subr.mxu0 0.0
    %355 = vmatpush1.msra.mxu0 0.0
    %356 = vmatprep.subr.mxu0 0.0
    %357 = vmatpush1.msra.mxu0 0.0
    %358 = vmatprep.mubr.f32.mxu0 0.0
    %359 = vmatmul.mubr.f32.gmra.mrb[0].mxu0 %v270
    %v360 = vpop.f32.mrb[0].mxu0
    %v361 = vadd.f32 %v292, %v360
    %v362 = vpop.f32.mrb[0].mxu0
    %363 = vdwg.mxu0
    %v364 = vmax.f32 %v361, 0.0
    %v365 = vld [vmem:[#allocation9] sm:$0xff]
    %v366 = vld [vmem:[#allocation9 + $0x8] sm:$0xff]
    %v367 = vld [vmem:[#allocation9 + $0x10] sm:$0xff]
    %v368 = vld [vmem:[#allocation9 + $0x18] sm:$0xff]
    %v369 = vld [vmem:[#allocation9 + $0x20] sm:$0xff]
    %v370 = vld [vmem:[#allocation9 + $0x28] sm:$0xff]
    %v371 = vld [vmem:[#allocation9 + $0x30] sm:$0xff]
    %v372 = vld [vmem:[#allocation9 + $0x38] sm:$0xff]
    %v373 = vld [vmem:[#allocation9 + $0x40] sm:$0xff]
    %v374 = vld [vmem:[#allocation9 + $0x48] sm:$0xff]
    %v375 = vld [vmem:[#allocation9 + $0x50] sm:$0xff]
    %v376 = vld [vmem:[#allocation9 + $0x58] sm:$0xff]
    %v377 = vld [vmem:[#allocation9 + $0x60] sm:$0xff]
    %v378 = vld [vmem:[#allocation9 + $0x68] sm:$0xff]
    %v379 = vld [vmem:[#allocation9 + $0x70] sm:$0xff]
    %v380 = vld [vmem:[#allocation9 + $0x78] sm:$0xff]
    %381 = vmatprep.subr.mxu0 0.0
    %382 = vmatpush1.msra.mxu0 %v365
    %383 = vmatprep.subr.mxu0 0.0
    %384 = vmatpush1.msra.mxu0 %v366
    %385 = vmatprep.subr.mxu0 0.0
    %386 = vmatpush1.msra.mxu0 %v367
    %387 = vmatprep.subr.mxu0 0.0
    %388 = vmatpush1.msra.mxu0 %v368
    %389 = vmatprep.subr.mxu0 0.0
    %390 = vmatpush1.msra.mxu0 %v369
    %391 = vmatprep.subr.mxu0 0.0
    %392 = vmatpush1.msra.mxu0 %v370
    %393 = vmatprep.subr.mxu0 0.0
    %394 = vmatpush1.msra.mxu0 %v371
    %395 = vmatprep.subr.mxu0 0.0
    %396 = vmatpush1.msra.mxu0 %v372
    %397 = vmatprep.subr.mxu0 0.0
    %398 = vmatpush1.msra.mxu0 %v373
    %399 = vmatprep.subr.mxu0 0.0
    %400 = vmatpush1.msra.mxu0 %v374
    %401 = vmatprep.subr.mxu0 0.0
    %402 = vmatpush1.msra.mxu0 %v375
    %403 = vmatprep.subr.mxu0 0.0
    %404 = vmatpush1.msra.mxu0 %v376
    %405 = vmatprep.subr.mxu0 0.0
    %406 = vmatpush1.msra.mxu0 %v377
    %407 = vmatprep.subr.mxu0 0.0
    %408 = vmatpush1.msra.mxu0 %v378
    %409 = vmatprep.subr.mxu0 0.0
    %410 = vmatpush1.msra.mxu0 %v379
    %411 = vmatprep.subr.mxu0 0.0
    %412 = vmatpush1.msra.mxu0 %v380
    %413 = vmatprep.subr.mxu0 0.0
    %414 = vmatpush1.msra.mxu0 0.0
    %415 = vmatprep.subr.mxu0 0.0
    %416 = vmatpush1.msra.mxu0 0.0
    %417 = vmatprep.subr.mxu0 0.0
    %418 = vmatpush1.msra.mxu0 0.0
    %419 = vmatprep.subr.mxu0 0.0
    %420 = vmatpush1.msra.mxu0 0.0
    %421 = vmatprep.subr.mxu0 0.0
    %422 = vmatpush1.msra.mxu0 0.0
    %423 = vmatprep.subr.mxu0 0.0
    %424 = vmatpush1.msra.mxu0 0.0
    %425 = vmatprep.subr.mxu0 0.0
    %426 = vmatpush1.msra.mxu0 0.0
    %427 = vmatprep.subr.mxu0 0.0
    %428 = vmatpush1.msra.mxu0 0.0
    %429 = vmatprep.subr.mxu0 0.0
    %430 = vmatpush1.msra.mxu0 0.0
    %431 = vmatprep.subr.mxu0 0.0
    %432 = vmatpush1.msra.mxu0 0.0
    %433 = vmatprep.subr.mxu0 0.0
    %434 = vmatpush1.msra.mxu0 0.0
    %435 = vmatprep.subr.mxu0 0.0
    %436 = vmatpush1.msra.mxu0 0.0
    %437 = vmatprep.subr.mxu0 0.0
    %438 = vmatpush1.msra.mxu0 0.0
    %439 = vmatprep.subr.mxu0 0.0
    %440 = vmatpush1.msra.mxu0 0.0
    %441 = vmatprep.subr.mxu0 0.0
    %442 = vmatpush1.msra.mxu0 0.0
    %443 = vmatprep.subr.mxu0 0.0
    %444 = vmatpush1.msra.mxu0 0.0
    %445 = vmatprep.mubr.f32.mxu0 0.0
    %446 = vmatmul.mubr.f32.gmra.mrb[0].mxu0 %v364
    %v447 = vpop.f32.mrb[0].mxu0
    %v448 = vadd.f32 0.0, %v447
    %v449 = vpop.f32.mrb[0].mxu0
    %450 = vdwg.mxu0
    %vm451 = vcmask 31744
    %452 = vst.msk [vmem:[%s8] sm:$0xff] %vm451, %v448
    // Predicated region
    $region54: #{tpu_custom_call.1} parent=1 // pred_check
      _
    $region55: #{tpu_custom_call.1} parent=1 // pred_check_branch
      %454 = sbr.rel (0) target = $region57
    $region56: #{tpu_custom_call.1} parent=1 // pred_region
      _
    $region57: #{tpu_custom_call.1} parent=1 // pred_fallthru
      _
    // Predicated region
    $region58: #{tpu_custom_call.1} parent=1 // pred_check
      _
    $region59: #{tpu_custom_call.1} parent=1 // pred_check_branch
      %456 = sbr.rel (0) target = $region61
    $region60: #{tpu_custom_call.1} parent=1 // pred_region
      _
    $region61: #{tpu_custom_call.1} parent=1 // pred_fallthru
      _
    %457 = vsyncpa [#allocation3], 1
    %458 = vsyncpa [#allocation5], 1
    %459 = vsyncpa [#allocation8], 1

</llo_original>
